<compile_context>
chip_gen: v7x
topology: tpu7x:2x2x1
jax: 0.10.0
libtpu: 0.0.40
codegen_flags: <defaults>
</compile_context>

<pallas_src>
import jax
import jax.numpy as jnp
from jax import lax
from jax.experimental import pallas as pl
from jax.experimental.pallas import tpu as pltpu

N_PAD = 128   # max stack depth supported by the kernel (one vreg of lanes)


def _stack_seq_kernel(t0_ref, u_ref, d_ref, s_init_ref,
                      s_out_ref, r_ref, s_scr):
    """One grid step == one neural-stack timestep.

    t0_ref     : SMEM (1,)   int32   stack depth before the first step
    u_ref      : SMEM (S,)   float32 pop signals
    d_ref      : SMEM (S,)   float32 push signals
    s_init_ref : VMEM (1, N_PAD)     initial strengths, zero-padded
    s_out_ref  : VMEM (1, N_PAD)     final strengths (written every step,
                                     flushed to HBM once at the end)
    r_ref      : VMEM (1, N_PAD)     this step's read value, lane-broadcast
    s_scr      : VMEM (1, N_PAD)     persistent strength state across steps
    """
    i = pl.program_id(0)

    @pl.when(i == 0)
    def _():
        s_scr[...] = s_init_ref[...]

    T = t0_ref[0] + i          # current depth before the push
    u = u_ref[i]
    d = d_ref[i]

    s = s_scr[...]             # (1, N_PAD), zero past lane T by construction
    n = s.shape[1]
    col = lax.broadcasted_iota(jnp.int32, (1, n), 1)

    def suffix_sum(row):
        # Exclusive suffix sum along lanes: out[k] = sum_{j > k} row[j].
        # Inclusive prefix via 7-step Hillis-Steele roll-and-add (XLU rolls,
        # VPU adds/selects), then suffix = total - prefix.
        x = row
        sh = 1
        while sh < n:
            rolled = pltpu.roll(x, shift=sh, axis=1)      # rolled[k] = x[k-sh]
            x = x + jnp.where(col >= sh, rolled, 0.0)     # mask wrap-around
            sh *= 2
        total = jnp.sum(row, axis=1, keepdims=True)
        return total - x

    # --- strength update: s_new[k] = relu(s[k] - relu(u - sum_{j>k} s[j])) ---
    suffix_old = suffix_sum(s)
    s_new = jnp.maximum(s - jnp.maximum(u - suffix_old, 0.0), 0.0)

    # --- push d at lane T, keep everything past T zero ---
    s_fin = jnp.where(col == T, d, s_new)
    s_fin = jnp.where(col <= T, s_fin, 0.0)
    s_scr[...] = s_fin
    s_out_ref[...] = s_fin

    # --- read: r = sum_k min(s_fin[k], relu(sum_{j>k} s_fin[j])) ---
    suffix_new = suffix_sum(s_fin)
    contrib = jnp.minimum(s_fin, jnp.maximum(suffix_new, 0.0))
    r_ref[...] = jnp.broadcast_to(
        jnp.sum(contrib, axis=1, keepdims=True), (1, n))


@jax.jit
def stack_sequence(t0, u_arr, d_arr, s_init):
    """Run num_steps neural-stack steps in one fused pallas_call."""
    num_steps = u_arr.shape[0]
    grid_spec = pltpu.PrefetchScalarGridSpec(
        num_scalar_prefetch=0,
        grid=(num_steps,),
        in_specs=[
            pl.BlockSpec(memory_space=pltpu.MemorySpace.SMEM),   # t0 (1,)
            pl.BlockSpec(memory_space=pltpu.MemorySpace.SMEM),   # u  (S,)
            pl.BlockSpec(memory_space=pltpu.MemorySpace.SMEM),   # d  (S,)
            pl.BlockSpec((1, N_PAD), lambda i: (0, 0)),          # s_init
        ],
        out_specs=(
            pl.BlockSpec((1, N_PAD), lambda i: (0, 0)),          # final s (resident)
            pl.BlockSpec((None, 1, N_PAD), lambda i: (i, 0, 0)), # per-step r rows
        ),
        scratch_shapes=[pltpu.VMEM((1, N_PAD), jnp.float32)],    # strength state
    )
    return pl.pallas_call(
        _stack_seq_kernel,
        grid_spec=grid_spec,
        out_shape=(
            jax.ShapeDtypeStruct((1, N_PAD), jnp.float32),
            jax.ShapeDtypeStruct((num_steps, 1, N_PAD), jnp.float32),
        ),
        compiler_params=pltpu.CompilerParams(
            dimension_semantics=("arbitrary",)),
    )(t0, u_arr, d_arr, s_init)


class PallasStack:
    """JAX/Pallas port of the PyTorch `Stack` module (stateful)."""

    def __init__(self, embedding_size):
        self.E = embedding_size
        self.V = jnp.zeros((0, embedding_size), jnp.float32)
        self.s = jnp.zeros((0,), jnp.float32)

    def forward_sequence(self, vs, us, ds):
        """Process a whole sequence of (v, u, d) in one fused kernel call.

        Returns the per-step read scalars, shape (num_steps,).
        """
        vs = jnp.asarray(vs, jnp.float32).reshape(-1, self.E)
        us = jnp.asarray(us, jnp.float32).reshape(-1)
        ds = jnp.asarray(ds, jnp.float32).reshape(-1)
        num_steps = vs.shape[0]
        assert us.shape[0] == num_steps and ds.shape[0] == num_steps

        T0 = int(self.s.shape[0])
        # Kernel drops the push silently if depth exceeds N_PAD; guard here.
        assert T0 + num_steps <= N_PAD, "stack depth exceeds kernel padding"

        # Glue: grow the value matrix (never used by the read in the reference).
        self.V = jnp.concatenate([self.V, vs], axis=0)

        s_pad = jnp.zeros((1, N_PAD), jnp.float32)
        if T0 > 0:
            s_pad = s_pad.at[0, :T0].set(self.s)

        s_fin, r = stack_sequence(jnp.array([T0], jnp.int32), us, ds, s_pad)
        self.s = s_fin[0, : T0 + num_steps]
        return r[:, 0, 0]

    def forward(self, v, u, d):
        """Single-step API matching the PyTorch module; returns scalar r."""
        return self.forward_sequence(
            jnp.asarray(v, jnp.float32).reshape(1, self.E),
            jnp.asarray([u], jnp.float32),
            jnp.asarray([d], jnp.float32))[0]


# ----------------------- reference (pure python) -----------------------
def _ref_step(s_old, u, d):
    T = len(s_old)
    s_new = []
    for i in range(T):
        old = sum(s_old[j] for j in range(i + 1, T))
        s_new.append(max(s_old[i] - max(u - old, 0.0), 0.0))
    s_fin = s_new + [d]
    r = 0.0
    for i in range(T + 1):
        old = sum(s_fin[j] for j in range(i + 1, T + 1))
        r += min(s_fin[i], max(old, 0.0))
    return s_fin, r


if __name__ == "__main__":
    E = 32
    key = jax.random.PRNGKey(0)

    # deterministic sequence of pop/push signals
    ops = [(0.0, 0.9), (0.1, 0.8), (0.3, 0.7), (0.6, 0.5),
           (0.2, 0.4), (0.8, 0.6), (0.05, 0.95), (0.4, 0.3)]
    num_steps = len(ops)
    us = [o[0] for o in ops]
    ds = [o[1] for o in ops]
    vs = jax.random.normal(key, (num_steps, 1, E), jnp.float32)

    ok = True

    # ---- fused multi-step path (one pallas_call for the whole sequence) ----
    stack = PallasStack(E)
    r_seq = jax.block_until_ready(stack.forward_sequence(vs, us, ds))

    s_ref = []
    for step in range(num_steps):
        s_ref, r_ref_val = _ref_step(s_ref, us[step], ds[step])
        if abs(float(r_seq[step]) - r_ref_val) > 1e-5:
            ok = False
    if not jnp.allclose(stack.s, jnp.array(s_ref, jnp.float32), atol=1e-5):
        ok = False

    # ---- stateful per-step API (exercises non-zero starting depth T0) ----
    stack2 = PallasStack(E)
    s_ref2 = []
    for step in range(3):
        r_one = float(jax.block_until_ready(
            stack2.forward(vs[step], us[step], ds[step])))
        s_ref2, r_ref2 = _ref_step(s_ref2, us[step], ds[step])
        if abs(r_one - r_ref2) > 1e-5:
            ok = False
    if not jnp.allclose(stack2.s, jnp.array(s_ref2, jnp.float32), atol=1e-5):
        ok = False

    assert ok, "Pallas neural-stack mismatch vs reference"
    print("KERNEL_OK")
</pallas_src>

<mosaic_0001>
module attributes {stable_mosaic.version = 11 : i64} {
  func.func @_stack_seq_kernel(%arg0: i32, %arg1: memref<1xi32, #tpu.memory_space<smem>>, %arg2: memref<8xf32, #tpu.memory_space<smem>>, %arg3: memref<8xf32, #tpu.memory_space<smem>>, %arg4: memref<1x128xf32, #tpu.memory_space<vmem>>, %arg5: memref<1x128xf32, #tpu.memory_space<vmem>>, %arg6: memref<1x1x128xf32, #tpu.memory_space<vmem>>, %arg7: memref<1x128xf32, #tpu.memory_space<vmem>>) attributes {dimension_semantics = [#tpu.dimension_semantics<arbitrary>], iteration_bounds = array<i64: 8>, scalar_prefetch = 0 : i64, scratch_operands = 1 : i64, tpu.core_type = #tpu.core_type<tc>, window_params = [{transform_indices = @transform_0, window_bounds = array<i64: 1>}, {transform_indices = @transform_1, window_bounds = array<i64: 8>}, {transform_indices = @transform_2, window_bounds = array<i64: 8>}, {pipeline_mode = #tpu.pipeline_mode<synchronous>, transform_indices = @transform_3, window_bounds = array<i64: 1, 128>}, {pipeline_mode = #tpu.pipeline_mode<synchronous>, transform_indices = @transform_4, window_bounds = array<i64: 1, 128>}, {transform_indices = @transform_5, window_bounds = array<i64: 1, 1, 128>}]} {
    %c0_i32 = arith.constant 0 : i32
    %0 = arith.cmpi eq, %arg0, %c0_i32 : i32
    %1 = arith.extui %0 : i1 to i32
    %c0_i32_0 = arith.constant 0 : i32
    %2 = arith.cmpi ne, %1, %c0_i32_0 : i32
    scf.if %2 {
      %c0_51 = arith.constant 0 : index
      %c0_52 = arith.constant 0 : index
      %130 = vector.load %arg4[%c0_51, %c0_52] : memref<1x128xf32, #tpu.memory_space<vmem>>, vector<1x128xf32>
      %c0_53 = arith.constant 0 : index
      %c0_54 = arith.constant 0 : index
      %131 = vector.load %arg7[%c0_53, %c0_54] : memref<1x128xf32, #tpu.memory_space<vmem>>, vector<1x128xf32>
      tpu.vector_store %arg7[%c0_53, %c0_54], %130 {strides = array<i32>} : memref<1x128xf32, #tpu.memory_space<vmem>>, vector<1x128xf32>,
    } else {
    }
    %c0 = arith.constant 0 : index
    %3 = memref.load %arg1[%c0] : memref<1xi32, #tpu.memory_space<smem>>
    %4 = arith.addi %3, %arg0 : i32
    %5 = arith.index_cast %arg0 : i32 to index
    %6 = memref.load %arg2[%5] : memref<8xf32, #tpu.memory_space<smem>>
    %7 = arith.index_cast %arg0 : i32 to index
    %8 = memref.load %arg3[%7] : memref<8xf32, #tpu.memory_space<smem>>
    %c0_1 = arith.constant 0 : index
    %c0_2 = arith.constant 0 : index
    %9 = vector.load %arg7[%c0_1, %c0_2] : memref<1x128xf32, #tpu.memory_space<vmem>>, vector<1x128xf32>
    %10 = tpu.iota {dimensions = array<i32: 1>} : vector<1x128xi32>
    %c1_i32 = arith.constant 1 : i32
    %11 = tpu.dynamic_rotate %9 by %c1_i32 dim 1 : vector<1x128xf32>, i32 -> vector<1x128xf32>
    %c1_i32_3 = arith.constant 1 : i32
    %12 = vector.broadcast %c1_i32_3 : i32 to vector<1x128xi32>
    %13 = arith.cmpi sge, %10, %12 : vector<1x128xi32>
    %cst = arith.constant 0.000000e+00 : f32
    %14 = vector.broadcast %cst : f32 to vector<1x128xf32>
    %15 = arith.select %13, %11, %14 : vector<1x128xi1>, vector<1x128xf32>
    %16 = arith.addf %9, %15 : vector<1x128xf32>
    %c2_i32 = arith.constant 2 : i32
    %17 = tpu.dynamic_rotate %16 by %c2_i32 dim 1 : vector<1x128xf32>, i32 -> vector<1x128xf32>
    %c2_i32_4 = arith.constant 2 : i32
    %18 = vector.broadcast %c2_i32_4 : i32 to vector<1x128xi32>
    %19 = arith.cmpi sge, %10, %18 : vector<1x128xi32>
    %cst_5 = arith.constant 0.000000e+00 : f32
    %20 = vector.broadcast %cst_5 : f32 to vector<1x128xf32>
    %21 = arith.select %19, %17, %20 : vector<1x128xi1>, vector<1x128xf32>
    %22 = arith.addf %16, %21 : vector<1x128xf32>
    %c4_i32 = arith.constant 4 : i32
    %23 = tpu.dynamic_rotate %22 by %c4_i32 dim 1 : vector<1x128xf32>, i32 -> vector<1x128xf32>
    %c4_i32_6 = arith.constant 4 : i32
    %24 = vector.broadcast %c4_i32_6 : i32 to vector<1x128xi32>
    %25 = arith.cmpi sge, %10, %24 : vector<1x128xi32>
    %cst_7 = arith.constant 0.000000e+00 : f32
    %26 = vector.broadcast %cst_7 : f32 to vector<1x128xf32>
    %27 = arith.select %25, %23, %26 : vector<1x128xi1>, vector<1x128xf32>
    %28 = arith.addf %22, %27 : vector<1x128xf32>
    %c8_i32 = arith.constant 8 : i32
    %29 = tpu.dynamic_rotate %28 by %c8_i32 dim 1 : vector<1x128xf32>, i32 -> vector<1x128xf32>
    %c8_i32_8 = arith.constant 8 : i32
    %30 = vector.broadcast %c8_i32_8 : i32 to vector<1x128xi32>
    %31 = arith.cmpi sge, %10, %30 : vector<1x128xi32>
    %cst_9 = arith.constant 0.000000e+00 : f32
    %32 = vector.broadcast %cst_9 : f32 to vector<1x128xf32>
    %33 = arith.select %31, %29, %32 : vector<1x128xi1>, vector<1x128xf32>
    %34 = arith.addf %28, %33 : vector<1x128xf32>
    %c16_i32 = arith.constant 16 : i32
    %35 = tpu.dynamic_rotate %34 by %c16_i32 dim 1 : vector<1x128xf32>, i32 -> vector<1x128xf32>
    %c16_i32_10 = arith.constant 16 : i32
    %36 = vector.broadcast %c16_i32_10 : i32 to vector<1x128xi32>
    %37 = arith.cmpi sge, %10, %36 : vector<1x128xi32>
    %cst_11 = arith.constant 0.000000e+00 : f32
    %38 = vector.broadcast %cst_11 : f32 to vector<1x128xf32>
    %39 = arith.select %37, %35, %38 : vector<1x128xi1>, vector<1x128xf32>
    %40 = arith.addf %34, %39 : vector<1x128xf32>
    %c32_i32 = arith.constant 32 : i32
    %41 = tpu.dynamic_rotate %40 by %c32_i32 dim 1 : vector<1x128xf32>, i32 -> vector<1x128xf32>
    %c32_i32_12 = arith.constant 32 : i32
    %42 = vector.broadcast %c32_i32_12 : i32 to vector<1x128xi32>
    %43 = arith.cmpi sge, %10, %42 : vector<1x128xi32>
    %cst_13 = arith.constant 0.000000e+00 : f32
    %44 = vector.broadcast %cst_13 : f32 to vector<1x128xf32>
    %45 = arith.select %43, %41, %44 : vector<1x128xi1>, vector<1x128xf32>
    %46 = arith.addf %40, %45 : vector<1x128xf32>
    %c64_i32 = arith.constant 64 : i32
    %47 = tpu.dynamic_rotate %46 by %c64_i32 dim 1 : vector<1x128xf32>, i32 -> vector<1x128xf32>
    %c64_i32_14 = arith.constant 64 : i32
    %48 = vector.broadcast %c64_i32_14 : i32 to vector<1x128xi32>
    %49 = arith.cmpi sge, %10, %48 : vector<1x128xi32>
    %cst_15 = arith.constant 0.000000e+00 : f32
    %50 = vector.broadcast %cst_15 : f32 to vector<1x128xf32>
    %51 = arith.select %49, %47, %50 : vector<1x128xi1>, vector<1x128xf32>
    %52 = arith.addf %46, %51 : vector<1x128xf32>
    %cst_16 = arith.constant dense<0.000000e+00> : vector<1xf32>
    %53 = vector.multi_reduction <add>, %9, %cst_16 [1] : vector<1x128xf32> to vector<1xf32>
    %54 = vector.shape_cast %53 : vector<1xf32> to vector<1x1xf32>
    %55 = vector.broadcast %54 : vector<1x1xf32> to vector<1x128xf32>
    %56 = arith.subf %55, %52 : vector<1x128xf32>
    %57 = vector.broadcast %6 : f32 to vector<1x128xf32>
    %58 = arith.subf %57, %56 : vector<1x128xf32>
    %cst_17 = arith.constant 0.000000e+00 : f32
    %59 = vector.broadcast %cst_17 : f32 to vector<1x128xf32>
    %60 = arith.maximumf %58, %59 : vector<1x128xf32>
    %61 = arith.subf %9, %60 : vector<1x128xf32>
    %cst_18 = arith.constant 0.000000e+00 : f32
    %62 = vector.broadcast %cst_18 : f32 to vector<1x128xf32>
    %63 = arith.maximumf %61, %62 : vector<1x128xf32>
    %64 = vector.broadcast %4 : i32 to vector<1x128xi32>
    %65 = arith.cmpi eq, %10, %64 : vector<1x128xi32>
    %66 = vector.broadcast %8 : f32 to vector<1x128xf32>
    %67 = arith.select %65, %66, %63 : vector<1x128xi1>, vector<1x128xf32>
    %68 = vector.broadcast %4 : i32 to vector<1x128xi32>
    %69 = arith.cmpi sle, %10, %68 : vector<1x128xi32>
    %cst_19 = arith.constant 0.000000e+00 : f32
    %70 = vector.broadcast %cst_19 : f32 to vector<1x128xf32>
    %71 = arith.select %69, %67, %70 : vector<1x128xi1>, vector<1x128xf32>
    %c0_20 = arith.constant 0 : index
    %c0_21 = arith.constant 0 : index
    %72 = vector.load %arg7[%c0_20, %c0_21] : memref<1x128xf32, #tpu.memory_space<vmem>>, vector<1x128xf32>
    tpu.vector_store %arg7[%c0_20, %c0_21], %71 {strides = array<i32>} : memref<1x128xf32, #tpu.memory_space<vmem>>, vector<1x128xf32>,
    %c0_22 = arith.constant 0 : index
    %c0_23 = arith.constant 0 : index
    %73 = vector.load %arg5[%c0_22, %c0_23] : memref<1x128xf32, #tpu.memory_space<vmem>>, vector<1x128xf32>
    tpu.vector_store %arg5[%c0_22, %c0_23], %71 {strides = array<i32>} : memref<1x128xf32, #tpu.memory_space<vmem>>, vector<1x128xf32>,
    %c1_i32_24 = arith.constant 1 : i32
    %74 = tpu.dynamic_rotate %71 by %c1_i32_24 dim 1 : vector<1x128xf32>, i32 -> vector<1x128xf32>
    %c1_i32_25 = arith.constant 1 : i32
    %75 = vector.broadcast %c1_i32_25 : i32 to vector<1x128xi32>
    %76 = arith.cmpi sge, %10, %75 : vector<1x128xi32>
    %cst_26 = arith.constant 0.000000e+00 : f32
    %77 = vector.broadcast %cst_26 : f32 to vector<1x128xf32>
    %78 = arith.select %76, %74, %77 : vector<1x128xi1>, vector<1x128xf32>
    %79 = arith.addf %71, %78 : vector<1x128xf32>
    %c2_i32_27 = arith.constant 2 : i32
    %80 = tpu.dynamic_rotate %79 by %c2_i32_27 dim 1 : vector<1x128xf32>, i32 -> vector<1x128xf32>
    %c2_i32_28 = arith.constant 2 : i32
    %81 = vector.broadcast %c2_i32_28 : i32 to vector<1x128xi32>
    %82 = arith.cmpi sge, %10, %81 : vector<1x128xi32>
    %cst_29 = arith.constant 0.000000e+00 : f32
    %83 = vector.broadcast %cst_29 : f32 to vector<1x128xf32>
    %84 = arith.select %82, %80, %83 : vector<1x128xi1>, vector<1x128xf32>
    %85 = arith.addf %79, %84 : vector<1x128xf32>
    %c4_i32_30 = arith.constant 4 : i32
    %86 = tpu.dynamic_rotate %85 by %c4_i32_30 dim 1 : vector<1x128xf32>, i32 -> vector<1x128xf32>
    %c4_i32_31 = arith.constant 4 : i32
    %87 = vector.broadcast %c4_i32_31 : i32 to vector<1x128xi32>
    %88 = arith.cmpi sge, %10, %87 : vector<1x128xi32>
    %cst_32 = arith.constant 0.000000e+00 : f32
    %89 = vector.broadcast %cst_32 : f32 to vector<1x128xf32>
    %90 = arith.select %88, %86, %89 : vector<1x128xi1>, vector<1x128xf32>
    %91 = arith.addf %85, %90 : vector<1x128xf32>
    %c8_i32_33 = arith.constant 8 : i32
    %92 = tpu.dynamic_rotate %91 by %c8_i32_33 dim 1 : vector<1x128xf32>, i32 -> vector<1x128xf32>
    %c8_i32_34 = arith.constant 8 : i32
    %93 = vector.broadcast %c8_i32_34 : i32 to vector<1x128xi32>
    %94 = arith.cmpi sge, %10, %93 : vector<1x128xi32>
    %cst_35 = arith.constant 0.000000e+00 : f32
    %95 = vector.broadcast %cst_35 : f32 to vector<1x128xf32>
    %96 = arith.select %94, %92, %95 : vector<1x128xi1>, vector<1x128xf32>
    %97 = arith.addf %91, %96 : vector<1x128xf32>
    %c16_i32_36 = arith.constant 16 : i32
    %98 = tpu.dynamic_rotate %97 by %c16_i32_36 dim 1 : vector<1x128xf32>, i32 -> vector<1x128xf32>
    %c16_i32_37 = arith.constant 16 : i32
    %99 = vector.broadcast %c16_i32_37 : i32 to vector<1x128xi32>
    %100 = arith.cmpi sge, %10, %99 : vector<1x128xi32>
    %cst_38 = arith.constant 0.000000e+00 : f32
    %101 = vector.broadcast %cst_38 : f32 to vector<1x128xf32>
    %102 = arith.select %100, %98, %101 : vector<1x128xi1>, vector<1x128xf32>
    %103 = arith.addf %97, %102 : vector<1x128xf32>
    %c32_i32_39 = arith.constant 32 : i32
    %104 = tpu.dynamic_rotate %103 by %c32_i32_39 dim 1 : vector<1x128xf32>, i32 -> vector<1x128xf32>
    %c32_i32_40 = arith.constant 32 : i32
    %105 = vector.broadcast %c32_i32_40 : i32 to vector<1x128xi32>
    %106 = arith.cmpi sge, %10, %105 : vector<1x128xi32>
    %cst_41 = arith.constant 0.000000e+00 : f32
    %107 = vector.broadcast %cst_41 : f32 to vector<1x128xf32>
    %108 = arith.select %106, %104, %107 : vector<1x128xi1>, vector<1x128xf32>
    %109 = arith.addf %103, %108 : vector<1x128xf32>
    %c64_i32_42 = arith.constant 64 : i32
    %110 = tpu.dynamic_rotate %109 by %c64_i32_42 dim 1 : vector<1x128xf32>, i32 -> vector<1x128xf32>
    %c64_i32_43 = arith.constant 64 : i32
    %111 = vector.broadcast %c64_i32_43 : i32 to vector<1x128xi32>
    %112 = arith.cmpi sge, %10, %111 : vector<1x128xi32>
    %cst_44 = arith.constant 0.000000e+00 : f32
    %113 = vector.broadcast %cst_44 : f32 to vector<1x128xf32>
    %114 = arith.select %112, %110, %113 : vector<1x128xi1>, vector<1x128xf32>
    %115 = arith.addf %109, %114 : vector<1x128xf32>
    %cst_45 = arith.constant dense<0.000000e+00> : vector<1xf32>
    %116 = vector.multi_reduction <add>, %71, %cst_45 [1] : vector<1x128xf32> to vector<1xf32>
    %117 = vector.shape_cast %116 : vector<1xf32> to vector<1x1xf32>
    %118 = vector.broadcast %117 : vector<1x1xf32> to vector<1x128xf32>
    %119 = arith.subf %118, %115 : vector<1x128xf32>
    %cst_46 = arith.constant 0.000000e+00 : f32
    %120 = vector.broadcast %cst_46 : f32 to vector<1x128xf32>
    %121 = arith.maximumf %119, %120 : vector<1x128xf32>
    %122 = arith.minimumf %71, %121 : vector<1x128xf32>
    %cst_47 = arith.constant dense<0.000000e+00> : vector<1xf32>
    %123 = vector.multi_reduction <add>, %122, %cst_47 [1] : vector<1x128xf32> to vector<1xf32>
    %124 = vector.shape_cast %123 : vector<1xf32> to vector<1x1xf32>
    %125 = vector.shape_cast %124 : vector<1x1xf32> to vector<1x1xf32>
    %126 = vector.broadcast %125 : vector<1x1xf32> to vector<1x128xf32>
    %c0_48 = arith.constant 0 : index
    %c0_49 = arith.constant 0 : index
    %c0_50 = arith.constant 0 : index
    %127 = vector.load %arg6[%c0_48, %c0_49, %c0_50] : memref<1x1x128xf32, #tpu.memory_space<vmem>>, vector<1x1x128xf32>
    %128 = vector.shape_cast %127 : vector<1x1x128xf32> to vector<1x128xf32>
    %129 = vector.shape_cast %126 : vector<1x128xf32> to vector<1x1x128xf32>
    tpu.vector_store %arg6[%c0_48, %c0_49, %c0_50], %129 {strides = array<i32>} : memref<1x1x128xf32, #tpu.memory_space<vmem>>, vector<1x1x128xf32>,
    return
  }
  func.func @transform_0(%arg0: i32) -> i32 {
    %c0_i32 = arith.constant 0 : i32
    %c0_i32_0 = arith.constant 0 : i32
    return %c0_i32 : i32
  }
  func.func @transform_1(%arg0: i32) -> i32 {
    %c0_i32 = arith.constant 0 : i32
    %c0_i32_0 = arith.constant 0 : i32
    return %c0_i32 : i32
  }
  func.func @transform_2(%arg0: i32) -> i32 {
    %c0_i32 = arith.constant 0 : i32
    %c0_i32_0 = arith.constant 0 : i32
    return %c0_i32 : i32
  }
  func.func @transform_3(%arg0: i32) -> (i32, i32) {
    %c0_i32 = arith.constant 0 : i32
    %c0_i32_0 = arith.constant 0 : i32
    %c0_i32_1 = arith.constant 0 : i32
    return %c0_i32, %c0_i32_0 : i32, i32
  }
  func.func @transform_4(%arg0: i32) -> (i32, i32) {
    %c0_i32 = arith.constant 0 : i32
    %c0_i32_0 = arith.constant 0 : i32
    %c0_i32_1 = arith.constant 0 : i32
    return %c0_i32, %c0_i32_0 : i32, i32
  }
  func.func @transform_5(%arg0: i32) -> (i32, i32, i32) {
    %c0_i32 = arith.constant 0 : i32
    %c0_i32_0 = arith.constant 0 : i32
    %c0_i32_1 = arith.constant 0 : i32
    return %arg0, %c0_i32, %c0_i32_0 : i32, i32, i32
  }
}

</mosaic_0001>

<llo_original>
// kernel: stack_sequence.1
$region0: #{stack_sequence.1}
  #allocation0 [shape = 'u32[]', space=smem, size = 0x4, offset = 0x4, fixed_abs, tag = 'smem constant byte address 0x4 - core index']
  #allocation1 [shape = 'u32[144,128]{1,0:T(1,128)}', space=vmem, size = 0x12000, scoped, tag = 'internal scratch']
  #allocation2 [shape = 'f32[1,128]{1,0:T(1,128)}', space=vmem, size = 0x200, scoped, tag = 'scratch operand']
  #allocation3 [shape = 's32[1]{0:T(128)S(6)}', space=smem, size = 0x200, scoped, tag = 'scoped memory for stack_sequence.1']
  %s0 = inlined_call_operand.<no memory space> [shape: s32[1], index: 0, kind: input, shape index: {}]
  %s1 = inlined_call_operand.vmem [shape: f32[8], index: 1, kind: input, shape index: {}]
  %s2 = inlined_call_operand.vmem [shape: f32[8], index: 2, kind: input, shape index: {}]
  %s3 = inlined_call_operand.vmem [shape: f32[1,128], index: 3, kind: input, shape index: {}]
  %s4 = inlined_call_operand.hbm [shape: f32[1,128], index: 4, kind: output, shape index: {0}]
  %s5 = inlined_call_operand.hbm [shape: f32[8,1,128], index: 5, kind: output, shape index: {1}]
  %6 = xla_tuple %s4, %s5
  %s7 = sld [smem:[#allocation0]]
  $region69: #{stack_sequence.1} parent=0
    _
  %s9 = ssub.s32 1, %s7
  %s10 = scalar_select 0, %s9, %s7
  %11 = sst [smem:[#allocation3]] %s0
  $region1: #{stack_sequence.1} parent=0
    #allocation4 [shape = 'u8[512]{0}', space=smem, size = 0x200, scoped, tag = 'input window, operand 1, single buffered']
    #allocation5 [shape = 's32[2]{0}', space=sflag, size = 0x8, scoped, tag = 'scoped memory for stack_sequence.1']
    #allocation6 [shape = 's32[2]{0}', space=sflag, size = 0x8, scoped, tag = 'scoped memory for stack_sequence.1']
    #allocation7 [shape = 'u8[512]{0}', space=smem, size = 0x200, scoped, tag = 'input window, operand 2, single buffered']
    #allocation8 [shape = 's32[1]{0}', space=sflag, size = 0x4, scoped, tag = 'scoped memory for stack_sequence.1']
    #allocation9 [shape = 'u8[512]{0}', space=vmem, size = 0x400, scoped, tag = 'output window, operand 0, single buffered']
    #allocation10 [shape = 'u8[1024]{0}', space=vmem, size = 0x400, scoped, tag = 'output window, operand 1']
    #allocation11 [shape = 's32[2]{0}', space=sflag, size = 0x8, scoped, tag = 'scoped memory for stack_sequence.1']
    %12 = vsyncpa [#allocation6], 0
    %13 = vsyncpa [#allocation8], 0
    %14 = vsyncpa [#allocation5], 0
    %15 = vsyncpa [#allocation11], 0
    %s16 = scalar_lea.sflag [#allocation11], 1
    %17 = vsyncpa %s16, 0
    loop: start=0, step=1, limit=10
    $region2: #{stack_sequence.1} parent=1 // loop_pre_header
      _
    $region3: #{stack_sequence.1} parent=1 // loop_header
      %s19 = sphi 0, %s23
      %p20 = scmp.ge.s32.totalorder %s19, 10
      %s27 = sphi 0, %s27
      %s29 = sphi 0, %s27
      %s30 = sphi 0, %s29
      %s44 = sphi 0, %s30
      %s48 = sphi 0, %s48
      %s50 = sphi 0, %s48
      %s51 = sphi 0, %s50
      %s65 = sphi 0, %s51
      %s69 = sphi 0, %s69
      %s71 = sphi 0, %s69
      %s72 = sphi 0, %s71
      %s86 = sphi 0, %s72
      %s90 = sphi 0, %s90
      %s92 = sphi 0, %s90
      %s93 = sphi 0, %s92
      %s107 = sphi 0, %s93
      %s111 = sphi 0, %s111
      %s113 = sphi 0, %s111
      %s114 = sphi 0, %s113
      %s128 = sphi 0, %s114
      %s134 = sphi 0, %s136
      %s137 = sphi 0, %s134
      %s138 = sphi 0, %s137
      %s154 = sphi 0, %s138
    $region4: #{stack_sequence.1} parent=1 // loop_header_branch
      %22 = sbr.rel (%p20) target = $region8
    $region5: #{stack_sequence.1} parent=1 // loop_body
      %s24 = ssub.s32 %s19, 1
      %s25 = ssub.s32 %s19, 2
      %s26 = sadd.s32 %s19, 1
      %s28 = sadd.s32 %s27, 1
      %p31 = scmp.eq.s32.totalorder %s19, 7
      %p32 = scmp.ne.s32.totalorder %s27, %s29
      %p33 = scmp.eq.s32.totalorder %s19, 0
      %p34 = por %p32, %p33
      %p35 = scmp.ne.s32.totalorder %s27, %s29
      %p36 = scmp.eq.s32.totalorder %s24, 7
      %p37 = por %p35, %p36
      %p38 = scmp.ne.s32.totalorder %s29, %s30
      %p39 = scmp.eq.s32.totalorder %s24, 0
      %p40 = por %p38, %p39
      %p41 = scmp.ne.s32.totalorder %s29, %s30
      %p42 = scmp.eq.s32.totalorder %s25, 7
      %p43 = por %p41, %p42
      %p45 = scmp.ne.s32.totalorder %s30, %s44
      %p46 = scmp.eq.s32.totalorder %s25, 0
      %p47 = por %p45, %p46
      %s49 = sadd.s32 %s48, 1
      %p52 = scmp.eq.s32.totalorder %s19, 7
      %p53 = scmp.ne.s32.totalorder %s48, %s50
      %p54 = scmp.eq.s32.totalorder %s19, 0
      %p55 = por %p53, %p54
      %p56 = scmp.ne.s32.totalorder %s48, %s50
      %p57 = scmp.eq.s32.totalorder %s24, 7
      %p58 = por %p56, %p57
      %p59 = scmp.ne.s32.totalorder %s50, %s51
      %p60 = scmp.eq.s32.totalorder %s24, 0
      %p61 = por %p59, %p60
      %p62 = scmp.ne.s32.totalorder %s50, %s51
      %p63 = scmp.eq.s32.totalorder %s25, 7
      %p64 = por %p62, %p63
      %p66 = scmp.ne.s32.totalorder %s51, %s65
      %p67 = scmp.eq.s32.totalorder %s25, 0
      %p68 = por %p66, %p67
      %s70 = sadd.s32 %s69, 1
      %p73 = scmp.eq.s32.totalorder %s19, 7
      %p74 = scmp.ne.s32.totalorder %s69, %s71
      %p75 = scmp.eq.s32.totalorder %s19, 0
      %p76 = por %p74, %p75
      %p77 = scmp.ne.s32.totalorder %s69, %s71
      %p78 = scmp.eq.s32.totalorder %s24, 7
      %p79 = por %p77, %p78
      %p80 = scmp.ne.s32.totalorder %s71, %s72
      %p81 = scmp.eq.s32.totalorder %s24, 0
      %p82 = por %p80, %p81
      %p83 = scmp.ne.s32.totalorder %s71, %s72
      %p84 = scmp.eq.s32.totalorder %s25, 7
      %p85 = por %p83, %p84
      %p87 = scmp.ne.s32.totalorder %s72, %s86
      %p88 = scmp.eq.s32.totalorder %s25, 0
      %p89 = por %p87, %p88
      %s91 = sadd.s32 %s90, 1
      %p94 = scmp.eq.s32.totalorder %s19, 7
      %p95 = scmp.ne.s32.totalorder %s90, %s92
      %p96 = scmp.eq.s32.totalorder %s19, 0
      %p97 = por %p95, %p96
      %p98 = scmp.ne.s32.totalorder %s90, %s92
      %p99 = scmp.eq.s32.totalorder %s24, 7
      %p100 = por %p98, %p99
      %p101 = scmp.ne.s32.totalorder %s92, %s93
      %p102 = scmp.eq.s32.totalorder %s24, 0
      %p103 = por %p101, %p102
      %p104 = scmp.ne.s32.totalorder %s92, %s93
      %p105 = scmp.eq.s32.totalorder %s25, 7
      %p106 = por %p104, %p105
      %p108 = scmp.ne.s32.totalorder %s93, %s107
      %p109 = scmp.eq.s32.totalorder %s25, 0
      %p110 = por %p108, %p109
      %s112 = sadd.s32 %s111, 1
      %p115 = scmp.eq.s32.totalorder %s19, 7
      %p116 = scmp.ne.s32.totalorder %s111, %s113
      %p117 = scmp.eq.s32.totalorder %s19, 0
      %p118 = por %p116, %p117
      %p119 = scmp.ne.s32.totalorder %s111, %s113
      %p120 = scmp.eq.s32.totalorder %s24, 7
      %p121 = por %p119, %p120
      %p122 = scmp.ne.s32.totalorder %s113, %s114
      %p123 = scmp.eq.s32.totalorder %s24, 0
      %p124 = por %p122, %p123
      %p125 = scmp.ne.s32.totalorder %s113, %s114
      %p126 = scmp.eq.s32.totalorder %s25, 7
      %p127 = por %p125, %p126
      %p129 = scmp.ne.s32.totalorder %s114, %s128
      %p130 = scmp.eq.s32.totalorder %s25, 0
      %p131 = por %p129, %p130
      %s132 = ssub.s32 %s19, %s26
      %p133 = scmp.eq.s32.totalorder %s132, 0
      %s135 = sadd.s32 %s134, 1
      %s136 = scalar_select %p133, %s134, %s135
      %p139 = pneg %p133
      %p140 = scmp.eq.s32.totalorder %s19, 7
      %p141 = por %p139, %p140
      %p142 = scmp.ne.s32.totalorder %s134, %s137
      %p143 = scmp.eq.s32.totalorder %s19, 0
      %p144 = por %p142, %p143
      %p145 = scmp.ne.s32.totalorder %s134, %s137
      %p146 = scmp.eq.s32.totalorder %s24, 7
      %p147 = por %p145, %p146
      %p148 = scmp.ne.s32.totalorder %s137, %s138
      %p149 = scmp.eq.s32.totalorder %s24, 0
      %p150 = por %p148, %p149
      %p151 = scmp.ne.s32.totalorder %s137, %s138
      %p152 = scmp.eq.s32.totalorder %s25, 7
      %p153 = por %p151, %p152
      %p155 = scmp.ne.s32.totalorder %s138, %s154
      %p156 = scmp.eq.s32.totalorder %s25, 0
      %p157 = por %p155, %p156
      %p158 = scmp.le.s32.totalorder 1, %s19
      %p159 = scmp.lt.s32.totalorder %s19, 9
      %p160 = pnand %p158, %p159
      %p161 = pneg %p160
      // Predicated region
      $region9: #{stack_sequence.1} parent=5 // pred_check
        _
      $region10: #{stack_sequence.1} parent=5 // pred_check_branch
        %163 = sbr.rel (%p160) target = $region12
      $region11: #{stack_sequence.1} parent=5 // pred_region
        %s164 = ssub.s32 %s19, 1
        // Predicated region
        $region13: #{stack_sequence.1} parent=11 // pred_check
          %p165 = pneg %p40
        $region14: #{stack_sequence.1} parent=11 // pred_check_branch
          %167 = sbr.rel (%p165) target = $region16
        $region15: #{stack_sequence.1} parent=11 // pred_region
          _
        $region16: #{stack_sequence.1} parent=11 // pred_fallthru
          _
        // Predicated region
        $region17: #{stack_sequence.1} parent=11 // pred_check
          %p168 = pneg %p61
        $region18: #{stack_sequence.1} parent=11 // pred_check_branch
          %170 = sbr.rel (%p168) target = $region20
        $region19: #{stack_sequence.1} parent=11 // pred_region
          %s172 = ssub.s32 16, 16
          %173 = vsyncadd [#allocation6], %s172
          %s175 = sshll.u32 %s1, 4
          %s176 = int_to_ptr.vmem [resolvable:$true] %s175
          %178 = dma.vmem_to_smem %s176, 16, [#allocation4], [#allocation6]
        $region20: #{stack_sequence.1} parent=11 // pred_fallthru
          _
        // Predicated region
        $region21: #{stack_sequence.1} parent=11 // pred_check
          %p179 = pneg %p82
        $region22: #{stack_sequence.1} parent=11 // pred_check_branch
          %181 = sbr.rel (%p179) target = $region24
        $region23: #{stack_sequence.1} parent=11 // pred_region
          %s183 = ssub.s32 16, 16
          %184 = vsyncadd [#allocation8], %s183
          %s186 = sshll.u32 %s2, 4
          %s187 = int_to_ptr.vmem [resolvable:$true] %s186
          %189 = dma.vmem_to_smem %s187, 16, [#allocation7], [#allocation8]
        $region24: #{stack_sequence.1} parent=11 // pred_fallthru
          _
        // Predicated region
        $region25: #{stack_sequence.1} parent=11 // pred_check
          %p190 = pneg %p103
        $region26: #{stack_sequence.1} parent=11 // pred_check_branch
          %192 = sbr.rel (%p190) target = $region28
        $region27: #{stack_sequence.1} parent=11 // pred_region
          _
        $region28: #{stack_sequence.1} parent=11 // pred_fallthru
          _
      $region12: #{stack_sequence.1} parent=5 // pred_fallthru
        _
      %p193 = scmp.lt.s32.totalorder %s19, 8
      // Predicated region
      $region29: #{stack_sequence.1} parent=5 // pred_check
        %p194 = pneg %p193
      $region30: #{stack_sequence.1} parent=5 // pred_check_branch
        %196 = sbr.rel (%p194) target = $region32
      $region31: #{stack_sequence.1} parent=5 // pred_region
        _
      $region32: #{stack_sequence.1} parent=5 // pred_fallthru
        _
      %p197 = scmp.le.s32.totalorder 1, %s19
      %p198 = scmp.lt.s32.totalorder %s19, 9
      %p199 = pnand %p197, %p198
      %p200 = pneg %p199
      // Predicated region
      $region33: #{stack_sequence.1} parent=5 // pred_check
        _
      $region34: #{stack_sequence.1} parent=5 // pred_check_branch
        %202 = sbr.rel (%p199) target = $region36
      $region35: #{stack_sequence.1} parent=5 // pred_region
        %s203 = ssub.s32 %s19, 1
        // Predicated region
        $region37: #{stack_sequence.1} parent=35 // pred_check
          %p204 = pneg %p61
        $region38: #{stack_sequence.1} parent=35 // pred_check_branch
          %206 = sbr.rel (%p204) target = $region40
        $region39: #{stack_sequence.1} parent=35 // pred_region
          %207 = dma.done [#allocation6], 16
        $region40: #{stack_sequence.1} parent=35 // pred_fallthru
          _
        // Predicated region
        $region41: #{stack_sequence.1} parent=35 // pred_check
          %p208 = pneg %p82
        $region42: #{stack_sequence.1} parent=35 // pred_check_branch
          %210 = sbr.rel (%p208) target = $region44
        $region43: #{stack_sequence.1} parent=35 // pred_region
          %211 = dma.done [#allocation8], 16
        $region44: #{stack_sequence.1} parent=35 // pred_fallthru
          _
        %212 = sfence
        %p213 = pneg %p40
        %p214 = pneg %p37
        %p215 = pneg %p61
        %p216 = pneg %p58
        %p217 = pneg %p82
        %p218 = pneg %p79
        %p219 = pneg %p103
        %p220 = pneg %p100
        %p221 = pneg %p124
        %p222 = pneg %p121
        %p223 = pneg %p150
        %p224 = pneg %p147
        %s225 = sand.u32 %s137, 1
        %s226 = scalar_lea.sflag [#allocation11], %s225
        %s227 = sand.u32 %s137, 1
        %s228 = scalar_lea.vmem [#allocation10], %s227
        %p229 = scmp.eq.s32.totalorder %s24, 0
        // Predicated region
        $region45: #{stack_sequence.1} parent=35 // pred_check
          %p230 = pneg %p229
        $region46: #{stack_sequence.1} parent=35 // pred_check_branch
          %232 = sbr.rel (%p230) target = $region48
        $region47: #{stack_sequence.1} parent=35 // pred_region
          %v233 = vld [vmem:[%s3] sm:$0x1]
          %234 = vst [vmem:[#allocation2] sm:$0x1] %v233
        $region48: #{stack_sequence.1} parent=35 // pred_fallthru
          _
        %s235 = sld [smem:[#allocation3]]
        %s236 = sadd.s32 %s235, %s24
        %s237 = sld [smem:[#allocation4 + %s24]]
        %s238 = sld [smem:[#allocation7 + %s24]]
        %v239 = vld [vmem:[#allocation2] sm:$0x1]
        %v240 = vlaneseq
        %v241 = vand.u32 %v240, 127
        %242 = vrot.lane.b32.xlu0 %v239, 1
        %v243 = vpop.permute.xlu0 %242
        %vm244 = vcmp.ge.s32.totalorder %v241, 1
        %v245 = vsel %vm244, %v243, 0.0
        %v246 = vadd.f32 %v239, %v245
        %247 = vrot.lane.b32.xlu0 %v246, 2
        %v248 = vpop.permute.xlu0 %247
        %vm249 = vcmp.ge.s32.totalorder %v241, 2
        %v250 = vsel %vm249, %v248, 0.0
        %v251 = vadd.f32 %v246, %v250
        %252 = vrot.lane.b32.xlu0 %v251, 4
        %v253 = vpop.permute.xlu0 %252
        %vm254 = vcmp.ge.s32.totalorder %v241, 4
        %v255 = vsel %vm254, %v253, 0.0
        %v256 = vadd.f32 %v251, %v255
        %257 = vrot.lane.b32.xlu0 %v256, 8
        %v258 = vpop.permute.xlu0 %257
        %vm259 = vcmp.ge.s32.totalorder %v241, 8
        %v260 = vsel %vm259, %v258, 0.0
        %v261 = vadd.f32 %v256, %v260
        %262 = vrot.lane.b32.xlu0 %v261, 16
        %v263 = vpop.permute.xlu0 %262
        %vm264 = vcmp.ge.s32.totalorder %v241, 16
        %v265 = vsel %vm264, %v263, 0.0
        %v266 = vadd.f32 %v261, %v265
        %267 = vrot.lane.b32.xlu0 %v266, 32
        %v268 = vpop.permute.xlu0 %267
        %vm269 = vcmp.ge.s32.totalorder %v241, 32
        %v270 = vsel %vm269, %v268, 0.0
        %v271 = vadd.f32 %v266, %v270
        %272 = vrot.lane.b32.xlu0 %v271, 64
        %v273 = vpop.permute.xlu0 %272
        %vm274 = vcmp.ge.s32.totalorder %v241, 64
        %v275 = vsel %vm274, %v273, 0.0
        %v276 = vadd.f32 %v271, %v275
        %vm277 = vcmask 1040384
        %v278 = vsel %vm277, %v239, 0.0
        %279 = vadd.xlane.f32.xlu0 %v278
        %v280 = vpop.xlane.xlu0 %279
        %v281 = vsub.f32 %v280, %v276
        %v282 = vstv %s237
        %v283 = vsub.f32 %v282, %v281
        %v284 = vmax.f32 %v283, 0.0
        %v285 = vsub.f32 %v239, %v284
        %v286 = vmax.f32 %v285, 0.0
        %v287 = vstv %s236
        %vm288 = vcmp.eq.s32.totalorder %v241, %v287
        %v289 = vstv %s238
        %v290 = vsel %vm288, %v289, %v286
        %vm291 = vcmp.le.s32.totalorder %v241, %v287
        %v292 = vsel %vm291, %v290, 0.0
        %293 = vst [vmem:[#allocation2] sm:$0x1] %v292
        %294 = vst [vmem:[#allocation9] sm:$0x1] %v292
        %295 = vrot.lane.b32.xlu0 %v292, 1
        %v296 = vpop.permute.xlu0 %295
        %v297 = vsel %vm244, %v296, 0.0
        %v298 = vadd.f32 %v292, %v297
        %299 = vrot.lane.b32.xlu0 %v298, 2
        %v300 = vpop.permute.xlu0 %299
        %v301 = vsel %vm249, %v300, 0.0
        %v302 = vadd.f32 %v298, %v301
        %303 = vrot.lane.b32.xlu0 %v302, 4
        %v304 = vpop.permute.xlu0 %303
        %v305 = vsel %vm254, %v304, 0.0
        %v306 = vadd.f32 %v302, %v305
        %307 = vrot.lane.b32.xlu0 %v306, 8
        %v308 = vpop.permute.xlu0 %307
        %v309 = vsel %vm259, %v308, 0.0
        %v310 = vadd.f32 %v306, %v309
        %311 = vrot.lane.b32.xlu0 %v310, 16
        %v312 = vpop.permute.xlu0 %311
        %v313 = vsel %vm264, %v312, 0.0
        %v314 = vadd.f32 %v310, %v313
        %315 = vrot.lane.b32.xlu0 %v314, 32
        %v316 = vpop.permute.xlu0 %315
        %v317 = vsel %vm269, %v316, 0.0
        %v318 = vadd.f32 %v314, %v317
        %319 = vrot.lane.b32.xlu0 %v318, 64
        %v320 = vpop.permute.xlu0 %319
        %v321 = vsel %vm274, %v320, 0.0
        %v322 = vadd.f32 %v318, %v321
        %v323 = vsel %vm277, %v292, 0.0
        %324 = vadd.xlane.f32.xlu0 %v323
        %v325 = vpop.xlane.xlu0 %324
        %v326 = vsub.f32 %v325, %v322
        %v327 = vmax.f32 %v326, 0.0
        %v328 = vmin.f32 %v292, %v327
        %v329 = vsel %vm277, %v328, 0.0
        %330 = vadd.xlane.f32.xlu0 %v329
        %v331 = vpop.xlane.xlu0 %330
        %332 = vst [vmem:[%s228] sm:$0x1] %v331
        %s333 = sand.u32 %s137, 1
        %s334 = scalar_lea.sflag [#allocation11], %s333
        %s335 = sand.u32 %s137, 1
        %s336 = scalar_lea.vmem [#allocation10], %s335
        // Predicated region
        $region49: #{stack_sequence.1} parent=35 // pred_check
          %p337 = pneg %p121
        $region50: #{stack_sequence.1} parent=35 // pred_check_branch
          %339 = sbr.rel (%p337) target = $region52
        $region51: #{stack_sequence.1} parent=35 // pred_region
          %s341 = ssub.s32 16, 16
          %342 = vsyncadd [#allocation5], %s341
          %s344 = sshll.u32 [#allocation9], 4
          %s345 = int_to_ptr.vmem [resolvable:$true] %s344
          %347 = dma.vmem_to_hbm [thread:$0]  %s345, 16, %s4, [#allocation5]
        $region52: #{stack_sequence.1} parent=35 // pred_fallthru
          _
        // Predicated region
        $region53: #{stack_sequence.1} parent=35 // pred_check
          %p348 = pneg %p147
        $region54: #{stack_sequence.1} parent=35 // pred_check_branch
          %350 = sbr.rel (%p348) target = $region56
        $region55: #{stack_sequence.1} parent=35 // pred_region
          %s352 = ssub.s32 16, 16
          %353 = vsyncadd %s334, %s352
          %s354 = smul.addr %s24, 16
          %s355 = scalar_lea.hbm %s5, %s354
          %s357 = sshll.u32 %s336, 4
          %s358 = int_to_ptr.vmem [resolvable:$true] %s357
          %360 = dma.vmem_to_hbm [thread:$0]  %s358, 16, %s355, %s334
        $region56: #{stack_sequence.1} parent=35 // pred_fallthru
          _
        // Predicated region
        $region57: #{stack_sequence.1} parent=35 // pred_check
          %p361 = pneg %p121
        $region58: #{stack_sequence.1} parent=35 // pred_check_branch
          %363 = sbr.rel (%p361) target = $region60
        $region59: #{stack_sequence.1} parent=35 // pred_region
          %364 = dma.done [#allocation5], 16
        $region60: #{stack_sequence.1} parent=35 // pred_fallthru
          _
      $region36: #{stack_sequence.1} parent=5 // pred_fallthru
        _
      %p365 = scmp.le.s32.totalorder 2, %s19
      // Predicated region
      $region61: #{stack_sequence.1} parent=5 // pred_check
        %p366 = pneg %p365
      $region62: #{stack_sequence.1} parent=5 // pred_check_branch
        %368 = sbr.rel (%p366) target = $region64
      $region63: #{stack_sequence.1} parent=5 // pred_region
        %s369 = ssub.s32 %s19, 2
        // Predicated region
        $region65: #{stack_sequence.1} parent=63 // pred_check
          %p370 = pneg %p153
        $region66: #{stack_sequence.1} parent=63 // pred_check_branch
          %372 = sbr.rel (%p370) target = $region68
        $region67: #{stack_sequence.1} parent=63 // pred_region
          %s373 = sand.u32 %s138, 1
          %s374 = scalar_lea.sflag [#allocation11], %s373
          %s375 = sand.u32 %s138, 1
          %s376 = scalar_lea.vmem [#allocation10], %s375
          %377 = dma.done %s374, 16
        $region68: #{stack_sequence.1} parent=63 // pred_fallthru
          _
      $region64: #{stack_sequence.1} parent=5 // pred_fallthru
        _
    $region6: #{stack_sequence.1} parent=1 // loop_footer
      %s23 = sadd.s32 1, %s19
    $region7: #{stack_sequence.1} parent=1 // loop_footer_branch
      %18 = sbr.rel target = $region3
    $region8: #{stack_sequence.1} parent=1 // loop_exit
      _
    %378 = vsyncpa [#allocation5], 1
    %s379 = scalar_lea.sflag [#allocation5], 1
    %380 = vsyncpa %s379, 1
    %381 = vsyncpa [#allocation11], 1
    %s382 = scalar_lea.sflag [#allocation11], 1
    %383 = vsyncpa %s382, 1
    %384 = vsyncpa [#allocation6], 1
    %s385 = scalar_lea.sflag [#allocation6], 1
    %386 = vsyncpa %s385, 1
    %387 = vsyncpa [#allocation8], 1

</llo_original>
